<compile_context>
chip_gen: v7x
topology: tpu7x:2x2x1
jax: 0.10.0
libtpu: 0.0.40
codegen_flags: <defaults>
</compile_context>

<pallas_src>
import functools

import numpy as np
import jax
import jax.numpy as jnp
from jax.experimental import pallas as pl
from jax.experimental.pallas import tpu as pltpu

BN_EPS = 1e-5
LEAKY_SLOPE = 0.2


# ------------------------------- the kernel --------------------------------
def _vdecoder_kernel(n_layers, out_dim, out_pad, *refs):
    """refs = (x, w_0..w_{n-1}, b_0..b_{n-1}, mu, sigma).

    Layers 0..n-2: BatchNorm(normalize) -> fused Linear -> LeakyReLU.
    Layer  n-1   : plain fused Linear (block-diag mu/sigma second layers).
    """
    x_ref = refs[0]
    w_refs = refs[1:1 + n_layers]
    b_refs = refs[1 + n_layers:1 + 2 * n_layers]
    mu_ref = refs[1 + 2 * n_layers]
    sg_ref = refs[2 + 2 * n_layers]

    inv_b = 1.0 / x_ref.shape[0]

    def _norm(v):
        # One-pass batch stats: the two sublane reductions are independent,
        # var = E[x^2] - mean^2.  (gamma/beta folded into the next Linear.)
        s1 = jnp.sum(v, axis=0, keepdims=True)
        s2 = jnp.sum(v * v, axis=0, keepdims=True)
        mean = s1 * inv_b
        var = s2 * inv_b - mean * mean
        return (v - mean) * jax.lax.rsqrt(var + BN_EPS)

    def _leaky(v):
        # LeakyReLU(0.2) == max(v, 0.2*v) for 0 < slope < 1.
        return jnp.maximum(v, LEAKY_SLOPE * v)

    h = x_ref[...]
    # Trunk + fused first head layer (static unroll; layer shapes differ so
    # dynamic indexing is not applicable at these sizes).
    for i in range(n_layers - 1):
        hn = _norm(h).astype(w_refs[i].dtype)          # bf16 for the MXU
        h = jnp.dot(hn, w_refs[i][...], preferred_element_type=jnp.float32)
        h = _leaky(h + b_refs[i][...])

    # Fused final Linear (block-diagonal mu/sigma), no BN / activation.
    t = h.astype(w_refs[n_layers - 1].dtype)
    o = jnp.dot(t, w_refs[n_layers - 1][...], preferred_element_type=jnp.float32)
    o = o + b_refs[n_layers - 1][...]

    # mu occupies lanes [0:out_dim]; sigma starts at the 128-aligned offset
    # out_pad, so both slices are vreg-aligned.
    mu_ref[...] = o[:, :out_dim]
    sg_ref[...] = o[:, out_pad:out_pad + out_dim]


# ------------------------------ python wrapper ------------------------------
def vdecoder_forward(x, weights, biases, out_dim, out_pad):
    B = x.shape[0]
    n_layers = len(weights)
    vmem = pl.BlockSpec(memory_space=pltpu.MemorySpace.VMEM)

    # Explicit scoped-VMEM budget: packed params + activations + headroom
    # (avoids v5e's 16 MiB default ceiling at larger configs, stays within
    # v7x's 64 MiB physical VMEM).
    in_bytes = x.size * x.dtype.itemsize
    for a in (*weights, *biases):
        in_bytes += a.size * a.dtype.itemsize
    out_bytes = 2 * B * out_dim * 4
    vmem_limit = int(min(64 << 20, max(32 << 20, 2 * (in_bytes + out_bytes) + (4 << 20))))

    kernel = functools.partial(_vdecoder_kernel, n_layers, out_dim, out_pad)
    mu, sigma = pl.pallas_call(
        kernel,
        out_shape=(jax.ShapeDtypeStruct((B, out_dim), jnp.float32),
                   jax.ShapeDtypeStruct((B, out_dim), jnp.float32)),
        in_specs=[vmem] * (1 + 2 * n_layers),
        out_specs=(vmem, vmem),
        compiler_params=pltpu.CompilerParams(vmem_limit_bytes=vmem_limit),
    )(x, *weights, *biases)
    return mu, sigma


# ---------------------------- parameter creation ----------------------------
def init_params(key, in_dim, latent_dim, out_dim):
    """Raw module-style parameters (same layout/semantics as nn.Module)."""
    dims = [in_dim] + list(latent_dim)

    def lin(k, d_in, d_out):
        k1, k2 = jax.random.split(k)
        bound = 1.0 / np.sqrt(d_in)
        w = jax.random.uniform(k1, (d_in, d_out), jnp.float32, -bound, bound)
        b = jax.random.uniform(k2, (1, d_out), jnp.float32, -bound, bound)
        return w, b

    def bn(d):
        return jnp.ones((1, d), jnp.float32), jnp.zeros((1, d), jnp.float32)

    keys = jax.random.split(key, max(len(dims), 1) + 4)
    params = []
    # fc trunk (layers 1 .. len(dims)-2)
    for i in range(1, len(dims) - 1):
        g, beta = bn(dims[i - 1])
        w, b = lin(keys[i], dims[i - 1], dims[i])
        params += [g, beta, w, b]
    # mu head
    g, beta = bn(dims[-2])
    w1, b1 = lin(keys[-4], dims[-2], dims[-1])
    w2, b2 = lin(keys[-3], dims[-1], out_dim)
    params += [g, beta, w1, b1, w2, b2]
    # sigma head
    g, beta = bn(dims[-2])
    w1, b1 = lin(keys[-2], dims[-2], dims[-1])
    w2, b2 = lin(keys[-1], dims[-1], out_dim)
    params += [g, beta, w1, b1, w2, b2]

    n_fc = len(dims) - 2
    return params, n_fc


def pack_params(params, in_dim, latent_dim, out_dim, weight_dtype=jnp.bfloat16):
    """Fold BN affine into the Linears, fuse the two heads, pad each layer to
    its OWN multiple-of-128 shape, and cast weights to bf16."""
    dims = [in_dim] + list(latent_dim)
    n_fc = len(dims) - 2
    head_l = dims[-1]
    rup = lambda n: int(max(128, -(-n // 128) * 128))

    def fold(g, beta, w, bias):
        g = np.asarray(g, np.float32).reshape(-1, 1)
        beta = np.asarray(beta, np.float32).reshape(1, -1)
        w = np.asarray(w, np.float32)
        bias = np.asarray(bias, np.float32).reshape(1, -1)
        return g * w, (beta @ w + bias).reshape(-1)

    def pad_w(w, kp, npad):
        out = np.zeros((kp, npad), np.float32)
        out[: w.shape[0], : w.shape[1]] = w
        return out

    def pad_b(b, npad):
        out = np.zeros((1, npad), np.float32)
        out[0, : b.shape[0]] = b
        return out

    ws, bs = [], []
    idx = 0
    prev_w = in_dim  # activation width entering the layer (x is unpadded)
    for i in range(1, n_fc + 1):
        g, beta, w, bias = params[idx:idx + 4]
        idx += 4
        wf, bf = fold(g, beta, w, bias)
        npad = rup(dims[i])
        ws.append(pad_w(wf, prev_w, npad))
        bs.append(pad_b(bf, npad))
        prev_w = npad

    # heads: shared normalization; first layers concatenated along N,
    # second layers block-diagonal with sigma at a 128-aligned column offset.
    g_m, be_m, w1_m, b1_m, w2_m, b2_m = params[idx: idx + 6]
    g_s, be_s, w1_s, b1_s, w2_s, b2_s = params[idx + 6: idx + 12]

    w1f_m, b1f_m = fold(g_m, be_m, w1_m, b1_m)
    w1f_s, b1f_s = fold(g_s, be_s, w1_s, b1_s)
    w1 = np.concatenate([w1f_m, w1f_s], axis=1)                 # [dims[-2], 2L]
    b1 = np.concatenate([b1f_m, b1f_s])
    n1pad = rup(2 * head_l)
    ws.append(pad_w(w1, prev_w, n1pad))
    bs.append(pad_b(b1, n1pad))

    out_pad = rup(out_dim)
    w2 = np.zeros((n1pad, 2 * out_pad), np.float32)
    w2[:head_l, :out_dim] = np.asarray(w2_m, np.float32)
    w2[head_l:2 * head_l, out_pad:out_pad + out_dim] = np.asarray(w2_s, np.float32)
    b2 = np.zeros((1, 2 * out_pad), np.float32)
    b2[0, :out_dim] = np.asarray(b2_m, np.float32).reshape(-1)
    b2[0, out_pad:out_pad + out_dim] = np.asarray(b2_s, np.float32).reshape(-1)
    ws.append(w2)
    bs.append(b2)

    weights = [jnp.asarray(w, weight_dtype) for w in ws]
    biases = [jnp.asarray(b, jnp.float32) for b in bs]
    return weights, biases, n_fc, out_pad


# ------------------------- pure-JAX reference check -------------------------
def reference(x, params, n_fc):
    def bn(v, g, b):
        m = v.mean(0, keepdims=True)
        var = ((v - m) ** 2).mean(0, keepdims=True)
        return (v - m) / jnp.sqrt(var + BN_EPS) * g + b

    def lr(v):
        return jnp.where(v >= 0, v, LEAKY_SLOPE * v)

    h = x
    idx = 0
    for _ in range(n_fc):
        g, b, w, bias = params[idx: idx + 4]
        idx += 4
        h = lr(jnp.dot(bn(h, g, b), w, precision="highest") + bias)

    def head(i):
        g, b, w1, b1, w2, b2 = params[i: i + 6]
        t = lr(jnp.dot(bn(h, g, b), w1, precision="highest") + b1)
        return jnp.dot(t, w2, precision="highest") + b2

    return head(idx), head(idx + 6)


if __name__ == "__main__":
    key = jax.random.PRNGKey(0)
    B, in_dim, latent_dim, out_dim = 8, 32, [64, 32], 16

    kx, kp = jax.random.split(key)
    x = jax.random.normal(kx, (B, in_dim), jnp.float32)
    params, n_fc = init_params(kp, in_dim, latent_dim, out_dim)
    weights, biases, n_fc, out_pad = pack_params(params, in_dim, latent_dim, out_dim)

    mu, sigma = vdecoder_forward(x, weights, biases, out_dim, out_pad)
    jax.block_until_ready((mu, sigma))

    # f32 reference with exact BN / 'highest' matmul precision; tolerance sized
    # for the bf16 weight quantization used on the MXU path.
    mu_ref, sigma_ref = reference(x, params, n_fc)
    assert mu.shape == (B, out_dim) and sigma.shape == (B, out_dim)
    assert np.allclose(np.asarray(mu), np.asarray(mu_ref), atol=2e-2, rtol=2e-2)
    assert np.allclose(np.asarray(sigma), np.asarray(sigma_ref), atol=2e-2, rtol=2e-2)

    print("KERNEL_OK")
</pallas_src>

<mosaic_0001>
module attributes {stable_mosaic.version = 11 : i64} {
  func.func @_vdecoder_kernel(%arg0: memref<8x32xf32, #tpu.memory_space<vmem>>, %arg1: memref<32x128xbf16, #tpu.memory_space<vmem>>, %arg2: memref<128x128xbf16, #tpu.memory_space<vmem>>, %arg3: memref<128x256xbf16, #tpu.memory_space<vmem>>, %arg4: memref<1x128xf32, #tpu.memory_space<vmem>>, %arg5: memref<1x128xf32, #tpu.memory_space<vmem>>, %arg6: memref<1x256xf32, #tpu.memory_space<vmem>>, %arg7: memref<8x16xf32, #tpu.memory_space<vmem>>, %arg8: memref<8x16xf32, #tpu.memory_space<vmem>>) attributes {dimension_semantics = [], scalar_prefetch = 0 : i64, scratch_operands = 0 : i64, tpu.core_type = #tpu.core_type<tc>} {
    %c0 = arith.constant 0 : index
    %c0_0 = arith.constant 0 : index
    %0 = vector.load %arg0[%c0, %c0_0] : memref<8x32xf32, #tpu.memory_space<vmem>>, vector<8x32xf32>
    %cst = arith.constant dense<0.000000e+00> : vector<32xf32>
    %1 = vector.multi_reduction <add>, %0, %cst [0] : vector<8x32xf32> to vector<32xf32>
    %2 = vector.shape_cast %1 : vector<32xf32> to vector<1x32xf32>
    %3 = arith.mulf %0, %0 : vector<8x32xf32>
    %cst_1 = arith.constant dense<0.000000e+00> : vector<32xf32>
    %4 = vector.multi_reduction <add>, %3, %cst_1 [0] : vector<8x32xf32> to vector<32xf32>
    %5 = vector.shape_cast %4 : vector<32xf32> to vector<1x32xf32>
    %cst_2 = arith.constant 1.250000e-01 : f32
    %6 = vector.broadcast %cst_2 : f32 to vector<1x32xf32>
    %7 = arith.mulf %2, %6 : vector<1x32xf32>
    %cst_3 = arith.constant 1.250000e-01 : f32
    %8 = vector.broadcast %cst_3 : f32 to vector<1x32xf32>
    %9 = arith.mulf %5, %8 : vector<1x32xf32>
    %10 = arith.mulf %7, %7 : vector<1x32xf32>
    %11 = arith.subf %9, %10 : vector<1x32xf32>
    %12 = vector.broadcast %7 : vector<1x32xf32> to vector<8x32xf32>
    %13 = arith.subf %0, %12 : vector<8x32xf32>
    %cst_4 = arith.constant 9.99999974E-6 : f32
    %14 = vector.broadcast %cst_4 : f32 to vector<1x32xf32>
    %15 = arith.addf %11, %14 : vector<1x32xf32>
    %16 = math.rsqrt %15 : vector<1x32xf32>
    %17 = vector.broadcast %16 : vector<1x32xf32> to vector<8x32xf32>
    %18 = arith.mulf %13, %17 : vector<8x32xf32>
    %19 = arith.truncf %18 : vector<8x32xf32> to vector<8x32xbf16>
    %c0_5 = arith.constant 0 : index
    %c0_6 = arith.constant 0 : index
    %20 = vector.load %arg1[%c0_5, %c0_6] : memref<32x128xbf16, #tpu.memory_space<vmem>>, vector<32x128xbf16>
    %cst_7 = arith.constant dense<0.000000e+00> : vector<8x128xf32>
    %21 = tpu.matmul %19, %20, %cst_7 {dimension_numbers = #tpu.dot_dimension_numbers<[1], [0], [0], [1], [0, 0, 1, 1], [], []>} : vector<8x32xbf16>, vector<32x128xbf16>, vector<8x128xf32> -> vector<8x128xf32>
    %c0_8 = arith.constant 0 : index
    %c0_9 = arith.constant 0 : index
    %22 = vector.load %arg4[%c0_8, %c0_9] : memref<1x128xf32, #tpu.memory_space<vmem>>, vector<1x128xf32>
    %23 = vector.broadcast %22 : vector<1x128xf32> to vector<8x128xf32>
    %24 = arith.addf %21, %23 : vector<8x128xf32>
    %cst_10 = arith.constant 2.000000e-01 : f32
    %25 = vector.broadcast %cst_10 : f32 to vector<8x128xf32>
    %26 = arith.mulf %25, %24 : vector<8x128xf32>
    %27 = arith.maximumf %24, %26 : vector<8x128xf32>
    %cst_11 = arith.constant dense<0.000000e+00> : vector<128xf32>
    %28 = vector.multi_reduction <add>, %27, %cst_11 [0] : vector<8x128xf32> to vector<128xf32>
    %29 = vector.shape_cast %28 : vector<128xf32> to vector<1x128xf32>
    %30 = arith.mulf %27, %27 : vector<8x128xf32>
    %cst_12 = arith.constant dense<0.000000e+00> : vector<128xf32>
    %31 = vector.multi_reduction <add>, %30, %cst_12 [0] : vector<8x128xf32> to vector<128xf32>
    %32 = vector.shape_cast %31 : vector<128xf32> to vector<1x128xf32>
    %cst_13 = arith.constant 1.250000e-01 : f32
    %33 = vector.broadcast %cst_13 : f32 to vector<1x128xf32>
    %34 = arith.mulf %29, %33 : vector<1x128xf32>
    %cst_14 = arith.constant 1.250000e-01 : f32
    %35 = vector.broadcast %cst_14 : f32 to vector<1x128xf32>
    %36 = arith.mulf %32, %35 : vector<1x128xf32>
    %37 = arith.mulf %34, %34 : vector<1x128xf32>
    %38 = arith.subf %36, %37 : vector<1x128xf32>
    %39 = vector.broadcast %34 : vector<1x128xf32> to vector<8x128xf32>
    %40 = arith.subf %27, %39 : vector<8x128xf32>
    %cst_15 = arith.constant 9.99999974E-6 : f32
    %41 = vector.broadcast %cst_15 : f32 to vector<1x128xf32>
    %42 = arith.addf %38, %41 : vector<1x128xf32>
    %43 = math.rsqrt %42 : vector<1x128xf32>
    %44 = vector.broadcast %43 : vector<1x128xf32> to vector<8x128xf32>
    %45 = arith.mulf %40, %44 : vector<8x128xf32>
    %46 = arith.truncf %45 : vector<8x128xf32> to vector<8x128xbf16>
    %c0_16 = arith.constant 0 : index
    %c0_17 = arith.constant 0 : index
    %47 = vector.load %arg2[%c0_16, %c0_17] : memref<128x128xbf16, #tpu.memory_space<vmem>>, vector<128x128xbf16>
    %cst_18 = arith.constant dense<0.000000e+00> : vector<8x128xf32>
    %48 = tpu.matmul %46, %47, %cst_18 {dimension_numbers = #tpu.dot_dimension_numbers<[1], [0], [0], [1], [0, 0, 1, 1], [], []>} : vector<8x128xbf16>, vector<128x128xbf16>, vector<8x128xf32> -> vector<8x128xf32>
    %c0_19 = arith.constant 0 : index
    %c0_20 = arith.constant 0 : index
    %49 = vector.load %arg5[%c0_19, %c0_20] : memref<1x128xf32, #tpu.memory_space<vmem>>, vector<1x128xf32>
    %50 = vector.broadcast %49 : vector<1x128xf32> to vector<8x128xf32>
    %51 = arith.addf %48, %50 : vector<8x128xf32>
    %cst_21 = arith.constant 2.000000e-01 : f32
    %52 = vector.broadcast %cst_21 : f32 to vector<8x128xf32>
    %53 = arith.mulf %52, %51 : vector<8x128xf32>
    %54 = arith.maximumf %51, %53 : vector<8x128xf32>
    %55 = arith.truncf %54 : vector<8x128xf32> to vector<8x128xbf16>
    %c0_22 = arith.constant 0 : index
    %c0_23 = arith.constant 0 : index
    %56 = vector.load %arg3[%c0_22, %c0_23] : memref<128x256xbf16, #tpu.memory_space<vmem>>, vector<128x256xbf16>
    %cst_24 = arith.constant dense<0.000000e+00> : vector<8x256xf32>
    %57 = tpu.matmul %55, %56, %cst_24 {dimension_numbers = #tpu.dot_dimension_numbers<[1], [0], [0], [1], [0, 0, 1, 1], [], []>} : vector<8x128xbf16>, vector<128x256xbf16>, vector<8x256xf32> -> vector<8x256xf32>
    %c0_25 = arith.constant 0 : index
    %c0_26 = arith.constant 0 : index
    %58 = vector.load %arg6[%c0_25, %c0_26] : memref<1x256xf32, #tpu.memory_space<vmem>>, vector<1x256xf32>
    %59 = vector.broadcast %58 : vector<1x256xf32> to vector<8x256xf32>
    %60 = arith.addf %57, %59 : vector<8x256xf32>
    %61 = vector.extract_strided_slice %60 {offsets = [0, 0], sizes = [8, 16], strides = [1, 1]} : vector<8x256xf32> to vector<8x16xf32>
    %c0_27 = arith.constant 0 : index
    %c0_28 = arith.constant 0 : index
    %62 = vector.load %arg7[%c0_27, %c0_28] : memref<8x16xf32, #tpu.memory_space<vmem>>, vector<8x16xf32>
    tpu.vector_store %arg7[%c0_27, %c0_28], %61 {strides = array<i32>} : memref<8x16xf32, #tpu.memory_space<vmem>>, vector<8x16xf32>,
    %63 = vector.extract_strided_slice %60 {offsets = [0, 128], sizes = [8, 16], strides = [1, 1]} : vector<8x256xf32> to vector<8x16xf32>
    %c0_29 = arith.constant 0 : index
    %c0_30 = arith.constant 0 : index
    %64 = vector.load %arg8[%c0_29, %c0_30] : memref<8x16xf32, #tpu.memory_space<vmem>>, vector<8x16xf32>
    tpu.vector_store %arg8[%c0_29, %c0_30], %63 {strides = array<i32>} : memref<8x16xf32, #tpu.memory_space<vmem>>, vector<8x16xf32>,
    return
  }
}

</mosaic_0001>

<llo_original>
// kernel: tpu_custom_call.1
$region0: #{tpu_custom_call.1}
  #allocation0 [shape = 'u32[]', space=smem, size = 0x4, offset = 0x4, fixed_abs, tag = 'smem constant byte address 0x4 - core index']
  #allocation1 [shape = 'u32[144,128]{1,0:T(1,128)}', space=vmem, size = 0x12000, scoped, tag = 'internal scratch']
  %s0 = inlined_call_operand.hbm [shape: f32[8,32], index: 0, kind: input, shape index: {}]
  %s1 = inlined_call_operand.hbm [shape: bf16[32,128], index: 1, kind: input, shape index: {}]
  %s2 = inlined_call_operand.hbm [shape: bf16[128,128], index: 2, kind: input, shape index: {}]
  %s3 = inlined_call_operand.hbm [shape: bf16[128,256], index: 3, kind: input, shape index: {}]
  %s4 = inlined_call_operand.vmem [shape: f32[1,128], index: 4, kind: input, shape index: {}]
  %s5 = inlined_call_operand.vmem [shape: f32[1,128], index: 5, kind: input, shape index: {}]
  %s6 = inlined_call_operand.vmem [shape: f32[1,256], index: 6, kind: input, shape index: {}]
  %s7 = inlined_call_operand.hbm [shape: f32[8,16], index: 7, kind: output, shape index: {0}]
  %s8 = inlined_call_operand.hbm [shape: f32[8,16], index: 8, kind: output, shape index: {1}]
  %9 = xla_tuple %s7, %s8
  %s10 = sld [smem:[#allocation0]]
  $region62: #{tpu_custom_call.1} parent=0
    _
  %s12 = ssub.s32 1, %s10
  %s13 = scalar_select 0, %s12, %s10
  $region1: #{tpu_custom_call.1} parent=0
    #allocation2 [shape = 'u8[4096]{0}', space=vmem, size = 0x1000, scoped, tag = 'input window, operand 0, single buffered']
    #allocation3 [shape = 's32[1]{0}', space=sflag, size = 0x4, scoped, tag = 'scoped memory for tpu_custom_call.1']
    #allocation4 [shape = 's32[1]{0}', space=sflag, size = 0x4, scoped, tag = 'scoped memory for tpu_custom_call.1']
    #allocation5 [shape = 'u8[8192]{0}', space=vmem, size = 0x2000, scoped, tag = 'input window, operand 1, single buffered']
    #allocation6 [shape = 's32[1]{0}', space=sflag, size = 0x4, scoped, tag = 'scoped memory for tpu_custom_call.1']
    #allocation7 [shape = 'u8[32768]{0}', space=vmem, size = 0x8000, scoped, tag = 'input window, operand 2, single buffered']
    #allocation8 [shape = 'u8[65536]{0}', space=vmem, size = 0x10000, scoped, tag = 'input window, operand 3, single buffered']
    #allocation9 [shape = 's32[1]{0}', space=sflag, size = 0x4, scoped, tag = 'scoped memory for tpu_custom_call.1']
    #allocation10 [shape = 'u8[4096]{0}', space=vmem, size = 0x1000, scoped, tag = 'output window, operand 0, single buffered']
    #allocation11 [shape = 'u8[4096]{0}', space=vmem, size = 0x1000, scoped, tag = 'output window, operand 1, single buffered']
    #allocation12 [shape = 's32[1]{0}', space=sflag, size = 0x4, scoped, tag = 'scoped memory for tpu_custom_call.1']
    %14 = vsyncpa [#allocation3], 0
    %15 = vsyncpa [#allocation6], 0
    %16 = vsyncpa [#allocation9], 0
    %17 = vsyncpa [#allocation4], 0
    %18 = vsyncpa [#allocation12], 0
    // Predicated region
    $region2: #{tpu_custom_call.1} parent=1 // pred_check
      _
    $region3: #{tpu_custom_call.1} parent=1 // pred_check_branch
      %20 = sbr.rel (0) target = $region5
    $region4: #{tpu_custom_call.1} parent=1 // pred_region
      %s22 = ssub.s32 128, 128
      %23 = vsyncadd [#allocation3], %s22
      %s25 = sshll.u32 [#allocation2], 4
      %s26 = int_to_ptr.vmem [resolvable:$true] %s25
      %28 = dma.hbm_to_vmem [thread:$0]  %s0, 128, %s26, [#allocation3]
    $region5: #{tpu_custom_call.1} parent=1 // pred_fallthru
      _
    // Predicated region
    $region6: #{tpu_custom_call.1} parent=1 // pred_check
      _
    $region7: #{tpu_custom_call.1} parent=1 // pred_check_branch
      %30 = sbr.rel (0) target = $region9
    $region8: #{tpu_custom_call.1} parent=1 // pred_region
      %s32 = ssub.s32 256, 256
      %33 = vsyncadd [#allocation6], %s32
      %s34 = sshll.u32 [#allocation5], 4
      %s35 = int_to_ptr.vmem [resolvable:$true] %s34
      %40 = dma.hbm_to_vmem [thread:$0]  %s1, 256, %s35, [#allocation6], 64, 64, 4
    $region9: #{tpu_custom_call.1} parent=1 // pred_fallthru
      _
    // Predicated region
    $region10: #{tpu_custom_call.1} parent=1 // pred_check
      _
    $region11: #{tpu_custom_call.1} parent=1 // pred_check_branch
      %42 = sbr.rel (0) target = $region13
    $region12: #{tpu_custom_call.1} parent=1 // pred_region
      %s44 = ssub.s32 1024, 1024
      %45 = vsyncadd [#allocation6], %s44
      %s46 = sshll.u32 [#allocation7], 4
      %s47 = int_to_ptr.vmem [resolvable:$true] %s46
      %52 = dma.hbm_to_vmem [thread:$0]  %s2, 1024, %s47, [#allocation6], 64, 64, 4
    $region13: #{tpu_custom_call.1} parent=1 // pred_fallthru
      _
    // Predicated region
    $region14: #{tpu_custom_call.1} parent=1 // pred_check
      _
    $region15: #{tpu_custom_call.1} parent=1 // pred_check_branch
      %54 = sbr.rel (0) target = $region17
    $region16: #{tpu_custom_call.1} parent=1 // pred_region
      %s56 = ssub.s32 2048, 2048
      %57 = vsyncadd [#allocation9], %s56
      %s58 = sshll.u32 [#allocation8], 4
      %s59 = int_to_ptr.vmem [resolvable:$true] %s58
      %64 = dma.hbm_to_vmem [thread:$0]  %s3, 2048, %s59, [#allocation9], 128, 128, 8
    $region17: #{tpu_custom_call.1} parent=1 // pred_fallthru
      _
    // Predicated region
    $region18: #{tpu_custom_call.1} parent=1 // pred_check
      _
    $region19: #{tpu_custom_call.1} parent=1 // pred_check_branch
      %66 = sbr.rel (0) target = $region21
    $region20: #{tpu_custom_call.1} parent=1 // pred_region
      _
    $region21: #{tpu_custom_call.1} parent=1 // pred_fallthru
      _
    // Predicated region
    $region22: #{tpu_custom_call.1} parent=1 // pred_check
      _
    $region23: #{tpu_custom_call.1} parent=1 // pred_check_branch
      %68 = sbr.rel (0) target = $region25
    $region24: #{tpu_custom_call.1} parent=1 // pred_region
      _
    $region25: #{tpu_custom_call.1} parent=1 // pred_fallthru
      _
    // Predicated region
    $region26: #{tpu_custom_call.1} parent=1 // pred_check
      _
    $region27: #{tpu_custom_call.1} parent=1 // pred_check_branch
      %70 = sbr.rel (0) target = $region29
    $region28: #{tpu_custom_call.1} parent=1 // pred_region
      _
    $region29: #{tpu_custom_call.1} parent=1 // pred_fallthru
      _
    // Predicated region
    $region30: #{tpu_custom_call.1} parent=1 // pred_check
      _
    $region31: #{tpu_custom_call.1} parent=1 // pred_check_branch
      %72 = sbr.rel (0) target = $region33
    $region32: #{tpu_custom_call.1} parent=1 // pred_region
      %73 = dma.done [#allocation3], 128
    $region33: #{tpu_custom_call.1} parent=1 // pred_fallthru
      _
    // Predicated region
    $region34: #{tpu_custom_call.1} parent=1 // pred_check
      _
    $region35: #{tpu_custom_call.1} parent=1 // pred_check_branch
      %75 = sbr.rel (0) target = $region37
    $region36: #{tpu_custom_call.1} parent=1 // pred_region
      %76 = dma.done [#allocation6], 256
    $region37: #{tpu_custom_call.1} parent=1 // pred_fallthru
      _
    // Predicated region
    $region38: #{tpu_custom_call.1} parent=1 // pred_check
      _
    $region39: #{tpu_custom_call.1} parent=1 // pred_check_branch
      %78 = sbr.rel (0) target = $region41
    $region40: #{tpu_custom_call.1} parent=1 // pred_region
      %79 = dma.done [#allocation6], 1024
    $region41: #{tpu_custom_call.1} parent=1 // pred_fallthru
      _
    // Predicated region
    $region42: #{tpu_custom_call.1} parent=1 // pred_check
      _
    $region43: #{tpu_custom_call.1} parent=1 // pred_check_branch
      %81 = sbr.rel (0) target = $region45
    $region44: #{tpu_custom_call.1} parent=1 // pred_region
      %82 = dma.done [#allocation9], 2048
    $region45: #{tpu_custom_call.1} parent=1 // pred_fallthru
      _
    %v84 = vld [vmem:[#allocation2] sm:$0xff]
    %vm85 = vcmask 261120
    %v86 = vsel %vm85, %v84, 0.0
    %v87 = vrot.slane %v86, 4
    %v88 = vadd.f32 %v86, %v87
    %v89 = vrot.slane %v88, 2
    %v90 = vadd.f32 %v88, %v89
    %v91 = vrot.slane %v90, 1
    %v92 = vadd.f32 %v90, %v91
    %v93 = vmul.f32 %v84, %v84
    %v94 = vsel %vm85, %v93, 0.0
    %v95 = vrot.slane %v94, 4
    %v96 = vadd.f32 %v94, %v95
    %v97 = vrot.slane %v96, 2
    %v98 = vadd.f32 %v96, %v97
    %v99 = vrot.slane %v98, 1
    %v100 = vadd.f32 %v98, %v99
    %v101 = vmul.f32 %v92, 0.125
    %v102 = vmul.f32 %v100, 0.125
    %v103 = vmul.f32 %v101, %v101
    %v104 = vsub.f32 %v102, %v103
    %v105 = vsub.f32 %v84, %v101
    %v106 = vadd.f32 %v104, 1e-05
    %v107 = vrsqrt.pop %v106
    %v108 = vmul.f32 %v105, %v107
    %v109 = vpack.c.bf16 %v108, %v108
    %v110 = vld [vmem:[#allocation5] sm:$0xf]
    %v111 = vld [vmem:[#allocation5 + $0x4] sm:$0xf]
    %v112 = vld [vmem:[#allocation5 + $0x8] sm:$0xf]
    %v113 = vld [vmem:[#allocation5 + $0xc] sm:$0xf]
    %v114 = vld [vmem:[%s4] sm:$0x1]
    %v116 = vlaneseq
    %v117 = vshrl.u32 %v116, 7
    %v118 = vsub.s32 0, %v117
    %v119 = vrot.slane %v114, %v118
    %v125 = vunpack.c.l.b16 %v110
    %v126 = vunpack.c.l.b16 %v111
    %v127 = vunpack.c.l.b16 %v112
    %v128 = vunpack.c.l.b16 %v113
    %v129 = vpack.c.b16 %v126, %v125
    %v130 = vpack.c.b16 %v128, %v127
    %v134 = vsel %vm85, %v109, 0
    %136 = vmatprep.subr.bf16.mxu0 0
    %137 = vmatpush1.bf16.msra.mxu0 %v129
    %138 = vmatprep.subr.bf16.mxu0 0
    %139 = vmatpush1.bf16.msra.mxu0 %v130
    %140 = vmatprep.subr.bf16.mxu0 0
    %141 = vmatpush1.bf16.msra.mxu0 0
    %142 = vmatprep.subr.bf16.mxu0 0
    %143 = vmatpush1.bf16.msra.mxu0 0
    %144 = vmatprep.subr.bf16.mxu0 0
    %145 = vmatpush1.bf16.msra.mxu0 0
    %146 = vmatprep.subr.bf16.mxu0 0
    %147 = vmatpush1.bf16.msra.mxu0 0
    %148 = vmatprep.subr.bf16.mxu0 0
    %149 = vmatpush1.bf16.msra.mxu0 0
    %150 = vmatprep.subr.bf16.mxu0 0
    %151 = vmatpush1.bf16.msra.mxu0 0
    %152 = vmatprep.subr.bf16.mxu0 0
    %153 = vmatpush1.bf16.msra.mxu0 0
    %154 = vmatprep.subr.bf16.mxu0 0
    %155 = vmatpush1.bf16.msra.mxu0 0
    %156 = vmatprep.subr.bf16.mxu0 0
    %157 = vmatpush1.bf16.msra.mxu0 0
    %158 = vmatprep.subr.bf16.mxu0 0
    %159 = vmatpush1.bf16.msra.mxu0 0
    %160 = vmatprep.subr.bf16.mxu0 0
    %161 = vmatpush1.bf16.msra.mxu0 0
    %162 = vmatprep.subr.bf16.mxu0 0
    %163 = vmatpush1.bf16.msra.mxu0 0
    %164 = vmatprep.subr.bf16.mxu0 0
    %165 = vmatpush1.bf16.msra.mxu0 0
    %166 = vmatprep.subr.bf16.mxu0 0
    %167 = vmatpush1.bf16.msra.mxu0 0
    %168 = vmatprep.mubr.bf16.mxu0 0
    %169 = vmatmul.mubr.bf16.gmra.mrb[0].mxu0 %v134
    %v170 = vpop.f32.mrb[0].mxu0
    %v171 = vadd.f32 %v119, %v170
    %v172 = vpop.f32.mrb[0].mxu0
    %v173 = vpop.f32.mrb[0].mxu0
    %v174 = vpop.f32.mrb[0].mxu0
    %175 = vdwg.mxu0
    %v176 = vmul.f32 %v171, 0.2
    %v177 = vmax.f32 %v171, %v176
    %v178 = vrot.slane %v177, 4
    %v179 = vadd.f32 %v177, %v178
    %v180 = vrot.slane %v179, 2
    %v181 = vadd.f32 %v179, %v180
    %v182 = vrot.slane %v181, 1
    %v183 = vadd.f32 %v181, %v182
    %v184 = vmul.f32 %v177, %v177
    %v185 = vrot.slane %v184, 4
    %v186 = vadd.f32 %v184, %v185
    %v187 = vrot.slane %v186, 2
    %v188 = vadd.f32 %v186, %v187
    %v189 = vrot.slane %v188, 1
    %v190 = vadd.f32 %v188, %v189
    %v191 = vmul.f32 %v183, 0.125
    %v192 = vmul.f32 %v190, 0.125
    %v193 = vmul.f32 %v191, %v191
    %v194 = vsub.f32 %v192, %v193
    %v195 = vsub.f32 %v177, %v191
    %v196 = vadd.f32 %v194, 1e-05
    %v197 = vrsqrt.pop %v196
    %v198 = vmul.f32 %v195, %v197
    %v199 = vpack.c.bf16 %v198, %v198
    %v200 = vld [vmem:[#allocation7] sm:$0xf]
    %v201 = vld [vmem:[#allocation7 + $0x4] sm:$0xf]
    %v202 = vld [vmem:[#allocation7 + $0x8] sm:$0xf]
    %v203 = vld [vmem:[#allocation7 + $0xc] sm:$0xf]
    %v204 = vld [vmem:[#allocation7 + $0x10] sm:$0xf]
    %v205 = vld [vmem:[#allocation7 + $0x14] sm:$0xf]
    %v206 = vld [vmem:[#allocation7 + $0x18] sm:$0xf]
    %v207 = vld [vmem:[#allocation7 + $0x1c] sm:$0xf]
    %v208 = vld [vmem:[#allocation7 + $0x20] sm:$0xf]
    %v209 = vld [vmem:[#allocation7 + $0x24] sm:$0xf]
    %v210 = vld [vmem:[#allocation7 + $0x28] sm:$0xf]
    %v211 = vld [vmem:[#allocation7 + $0x2c] sm:$0xf]
    %v212 = vld [vmem:[#allocation7 + $0x30] sm:$0xf]
    %v213 = vld [vmem:[#allocation7 + $0x34] sm:$0xf]
    %v214 = vld [vmem:[#allocation7 + $0x38] sm:$0xf]
    %v215 = vld [vmem:[#allocation7 + $0x3c] sm:$0xf]
    %v216 = vld [vmem:[%s5] sm:$0x1]
    %v218 = vlaneseq
    %v219 = vshrl.u32 %v218, 7
    %v220 = vsub.s32 0, %v219
    %v221 = vrot.slane %v216, %v220
    %v239 = vunpack.c.l.b16 %v200
    %v240 = vunpack.c.l.b16 %v201
    %v241 = vunpack.c.l.b16 %v202
    %v242 = vunpack.c.l.b16 %v203
    %v243 = vunpack.c.l.b16 %v204
    %v244 = vunpack.c.l.b16 %v205
    %v245 = vunpack.c.l.b16 %v206
    %v246 = vunpack.c.l.b16 %v207
    %v247 = vunpack.c.l.b16 %v208
    %v248 = vunpack.c.l.b16 %v209
    %v249 = vunpack.c.l.b16 %v210
    %v250 = vunpack.c.l.b16 %v211
    %v251 = vunpack.c.l.b16 %v212
    %v252 = vunpack.c.l.b16 %v213
    %v253 = vunpack.c.l.b16 %v214
    %v254 = vunpack.c.l.b16 %v215
    %v255 = vpack.c.b16 %v240, %v239
    %v256 = vpack.c.b16 %v242, %v241
    %v257 = vpack.c.b16 %v244, %v243
    %v258 = vpack.c.b16 %v246, %v245
    %v259 = vpack.c.b16 %v248, %v247
    %v260 = vpack.c.b16 %v250, %v249
    %v261 = vpack.c.b16 %v252, %v251
    %v262 = vpack.c.b16 %v254, %v253
    %271 = vmatprep.subr.bf16.mxu0 0
    %272 = vmatpush1.bf16.msra.mxu0 %v255
    %273 = vmatprep.subr.bf16.mxu0 0
    %274 = vmatpush1.bf16.msra.mxu0 %v256
    %275 = vmatprep.subr.bf16.mxu0 0
    %276 = vmatpush1.bf16.msra.mxu0 %v257
    %277 = vmatprep.subr.bf16.mxu0 0
    %278 = vmatpush1.bf16.msra.mxu0 %v258
    %279 = vmatprep.subr.bf16.mxu0 0
    %280 = vmatpush1.bf16.msra.mxu0 %v259
    %281 = vmatprep.subr.bf16.mxu0 0
    %282 = vmatpush1.bf16.msra.mxu0 %v260
    %283 = vmatprep.subr.bf16.mxu0 0
    %284 = vmatpush1.bf16.msra.mxu0 %v261
    %285 = vmatprep.subr.bf16.mxu0 0
    %286 = vmatpush1.bf16.msra.mxu0 %v262
    %287 = vmatprep.subr.bf16.mxu0 0
    %288 = vmatpush1.bf16.msra.mxu0 0
    %289 = vmatprep.subr.bf16.mxu0 0
    %290 = vmatpush1.bf16.msra.mxu0 0
    %291 = vmatprep.subr.bf16.mxu0 0
    %292 = vmatpush1.bf16.msra.mxu0 0
    %293 = vmatprep.subr.bf16.mxu0 0
    %294 = vmatpush1.bf16.msra.mxu0 0
    %295 = vmatprep.subr.bf16.mxu0 0
    %296 = vmatpush1.bf16.msra.mxu0 0
    %297 = vmatprep.subr.bf16.mxu0 0
    %298 = vmatpush1.bf16.msra.mxu0 0
    %299 = vmatprep.subr.bf16.mxu0 0
    %300 = vmatpush1.bf16.msra.mxu0 0
    %301 = vmatprep.subr.bf16.mxu0 0
    %302 = vmatpush1.bf16.msra.mxu0 0
    %303 = vmatprep.mubr.bf16.mxu0 0
    %304 = vmatmul.mubr.bf16.gmra.mrb[0].mxu0 %v199
    %v305 = vpop.f32.mrb[0].mxu0
    %v306 = vadd.f32 %v221, %v305
    %v307 = vpop.f32.mrb[0].mxu0
    %v308 = vpop.f32.mrb[0].mxu0
    %v309 = vpop.f32.mrb[0].mxu0
    %310 = vdwg.mxu0
    %v311 = vmul.f32 %v306, 0.2
    %v312 = vmax.f32 %v306, %v311
    %v313 = vpack.c.bf16 %v312, %v312
    %v314 = vld [vmem:[#allocation8] sm:$0xff]
    %v315 = vld [vmem:[#allocation8 + $0x8] sm:$0xff]
    %v316 = vld [vmem:[#allocation8 + $0x10] sm:$0xff]
    %v317 = vld [vmem:[#allocation8 + $0x18] sm:$0xff]
    %v318 = vld [vmem:[#allocation8 + $0x20] sm:$0xff]
    %v319 = vld [vmem:[#allocation8 + $0x28] sm:$0xff]
    %v320 = vld [vmem:[#allocation8 + $0x30] sm:$0xff]
    %v321 = vld [vmem:[#allocation8 + $0x38] sm:$0xff]
    %v322 = vld [vmem:[#allocation8 + $0x40] sm:$0xff]
    %v323 = vld [vmem:[#allocation8 + $0x48] sm:$0xff]
    %v324 = vld [vmem:[#allocation8 + $0x50] sm:$0xff]
    %v325 = vld [vmem:[#allocation8 + $0x58] sm:$0xff]
    %v326 = vld [vmem:[#allocation8 + $0x60] sm:$0xff]
    %v327 = vld [vmem:[#allocation8 + $0x68] sm:$0xff]
    %v328 = vld [vmem:[#allocation8 + $0x70] sm:$0xff]
    %v329 = vld [vmem:[#allocation8 + $0x78] sm:$0xff]
    %v330 = vld [vmem:[%s6] sm:$0x3]
    %v332 = vlaneseq
    %v333 = vshrl.u32 %v332, 7
    %v334 = vsub.s32 0, %v333
    %v335 = vrot.slane %v330, %v334
    %v336 = vlaneseq
    %v337 = vshrl.u32 %v336, 7
    %v338 = vsub.s32 1, %v337
    %v339 = vrot.slane %v330, %v338
    %v358 = vunpack.c.l.b16 %v314
    %v359 = vunpack.c.h.b16 %v314
    %v360 = vunpack.c.l.b16 %v315
    %v361 = vunpack.c.h.b16 %v315
    %v362 = vunpack.c.l.b16 %v316
    %v363 = vunpack.c.h.b16 %v316
    %v364 = vunpack.c.l.b16 %v317
    %v365 = vunpack.c.h.b16 %v317
    %v366 = vunpack.c.l.b16 %v318
    %v367 = vunpack.c.h.b16 %v318
    %v368 = vunpack.c.l.b16 %v319
    %v369 = vunpack.c.h.b16 %v319
    %v370 = vunpack.c.l.b16 %v320
    %v371 = vunpack.c.h.b16 %v320
    %v372 = vunpack.c.l.b16 %v321
    %v373 = vunpack.c.h.b16 %v321
    %v374 = vunpack.c.l.b16 %v322
    %v375 = vunpack.c.h.b16 %v322
    %v376 = vunpack.c.l.b16 %v323
    %v377 = vunpack.c.h.b16 %v323
    %v378 = vunpack.c.l.b16 %v324
    %v379 = vunpack.c.h.b16 %v324
    %v380 = vunpack.c.l.b16 %v325
    %v381 = vunpack.c.h.b16 %v325
    %v382 = vunpack.c.l.b16 %v326
    %v383 = vunpack.c.h.b16 %v326
    %v384 = vunpack.c.l.b16 %v327
    %v385 = vunpack.c.h.b16 %v327
    %v386 = vunpack.c.l.b16 %v328
    %v387 = vunpack.c.h.b16 %v328
    %v388 = vunpack.c.l.b16 %v329
    %v389 = vunpack.c.h.b16 %v329
    %v390 = vpack.c.b16 %v360, %v358
    %v391 = vpack.c.b16 %v361, %v359
    %v392 = vpack.c.b16 %v364, %v362
    %v393 = vpack.c.b16 %v365, %v363
    %v394 = vpack.c.b16 %v368, %v366
    %v395 = vpack.c.b16 %v369, %v367
    %v396 = vpack.c.b16 %v372, %v370
    %v397 = vpack.c.b16 %v373, %v371
    %v398 = vpack.c.b16 %v376, %v374
    %v399 = vpack.c.b16 %v377, %v375
    %v400 = vpack.c.b16 %v380, %v378
    %v401 = vpack.c.b16 %v381, %v379
    %v402 = vpack.c.b16 %v384, %v382
    %v403 = vpack.c.b16 %v385, %v383
    %v404 = vpack.c.b16 %v388, %v386
    %v405 = vpack.c.b16 %v389, %v387
    %422 = vmatprep.subr.bf16.mxu0 %v391
    %423 = vmatpush1.bf16.msra.mxu0 %v390
    %424 = vmatprep.subr.bf16.mxu0 %v393
    %425 = vmatpush1.bf16.msra.mxu0 %v392
    %426 = vmatprep.subr.bf16.mxu0 %v395
    %427 = vmatpush1.bf16.msra.mxu0 %v394
    %428 = vmatprep.subr.bf16.mxu0 %v397
    %429 = vmatpush1.bf16.msra.mxu0 %v396
    %430 = vmatprep.subr.bf16.mxu0 %v399
    %431 = vmatpush1.bf16.msra.mxu0 %v398
    %432 = vmatprep.subr.bf16.mxu0 %v401
    %433 = vmatpush1.bf16.msra.mxu0 %v400
    %434 = vmatprep.subr.bf16.mxu0 %v403
    %435 = vmatpush1.bf16.msra.mxu0 %v402
    %436 = vmatprep.subr.bf16.mxu0 %v405
    %437 = vmatpush1.bf16.msra.mxu0 %v404
    %438 = vmatprep.subr.bf16.mxu0 0
    %439 = vmatpush1.bf16.msra.mxu0 0
    %440 = vmatprep.subr.bf16.mxu0 0
    %441 = vmatpush1.bf16.msra.mxu0 0
    %442 = vmatprep.subr.bf16.mxu0 0
    %443 = vmatpush1.bf16.msra.mxu0 0
    %444 = vmatprep.subr.bf16.mxu0 0
    %445 = vmatpush1.bf16.msra.mxu0 0
    %446 = vmatprep.subr.bf16.mxu0 0
    %447 = vmatpush1.bf16.msra.mxu0 0
    %448 = vmatprep.subr.bf16.mxu0 0
    %449 = vmatpush1.bf16.msra.mxu0 0
    %450 = vmatprep.subr.bf16.mxu0 0
    %451 = vmatpush1.bf16.msra.mxu0 0
    %452 = vmatprep.subr.bf16.mxu0 0
    %453 = vmatpush1.bf16.msra.mxu0 0
    %454 = vmatprep.mubr.bf16.mxu0 0
    %455 = vmatmul.mubr.bf16.gmra.mrb[0].mxu0 %v313
    %v456 = vpop.f32.mrb[0].mxu0
    %v457 = vadd.f32 %v335, %v456
    %v458 = vpop.f32.mrb[0].mxu0
    %v459 = vadd.f32 %v339, %v458
    %v460 = vpop.f32.mrb[0].mxu0
    %v461 = vpop.f32.mrb[0].mxu0
    %462 = vdwg.mxu0
    %vm463 = vcmask 130048
    %464 = vst.msk [vmem:[#allocation10] sm:$0xff] %vm463, %v457
    %465 = vst.msk [vmem:[#allocation11] sm:$0xff] %vm463, %v459
    // Predicated region
    $region46: #{tpu_custom_call.1} parent=1 // pred_check
      _
    $region47: #{tpu_custom_call.1} parent=1 // pred_check_branch
      %467 = sbr.rel (0) target = $region49
    $region48: #{tpu_custom_call.1} parent=1 // pred_region
      %s469 = ssub.s32 128, 128
      %470 = vsyncadd [#allocation4], %s469
      %s472 = sshll.u32 [#allocation10], 4
      %s473 = int_to_ptr.vmem [resolvable:$true] %s472
      %475 = dma.vmem_to_hbm [thread:$0]  %s473, 128, %s7, [#allocation4]
    $region49: #{tpu_custom_call.1} parent=1 // pred_fallthru
      _
    // Predicated region
    $region50: #{tpu_custom_call.1} parent=1 // pred_check
      _
    $region51: #{tpu_custom_call.1} parent=1 // pred_check_branch
      %477 = sbr.rel (0) target = $region53
    $region52: #{tpu_custom_call.1} parent=1 // pred_region
      %s479 = ssub.s32 128, 128
      %480 = vsyncadd [#allocation12], %s479
      %s482 = sshll.u32 [#allocation11], 4
      %s483 = int_to_ptr.vmem [resolvable:$true] %s482
      %485 = dma.vmem_to_hbm [thread:$0]  %s483, 128, %s8, [#allocation12]
    $region53: #{tpu_custom_call.1} parent=1 // pred_fallthru
      _
    // Predicated region
    $region54: #{tpu_custom_call.1} parent=1 // pred_check
      _
    $region55: #{tpu_custom_call.1} parent=1 // pred_check_branch
      %487 = sbr.rel (0) target = $region57
    $region56: #{tpu_custom_call.1} parent=1 // pred_region
      %488 = dma.done [#allocation4], 128
    $region57: #{tpu_custom_call.1} parent=1 // pred_fallthru
      _
    // Predicated region
    $region58: #{tpu_custom_call.1} parent=1 // pred_check
      _
    $region59: #{tpu_custom_call.1} parent=1 // pred_check_branch
      %490 = sbr.rel (0) target = $region61
    $region60: #{tpu_custom_call.1} parent=1 // pred_region
      %491 = dma.done [#allocation12], 128
    $region61: #{tpu_custom_call.1} parent=1 // pred_fallthru
      _
    %492 = vsyncpa [#allocation3], 1
    %493 = vsyncpa [#allocation6], 1
    %494 = vsyncpa [#allocation9], 1
    %495 = vsyncpa [#allocation4], 1
    %496 = vsyncpa [#allocation12], 1

</llo_original>
